<compile_context>
chip_gen: v6e
topology: v6e:2x2x1
jax: 0.10.0
libtpu: 0.0.40
codegen_flags: <defaults>
</compile_context>

<pallas_src>
import functools

import jax
import jax.numpy as jnp
from jax.experimental import pallas as pl
from jax.experimental.pallas import tpu as pltpu


def _round_up(x, m):
    return ((x + m - 1) // m) * m


def qnet_kernel(x_ref, w1_ref, b1_ref, w2_ref, b2_ref, w3_ref, b3_ref, o_ref):
    # x streamed f32 from HBM, cast to bf16 on the VPU right before the MXU.
    # Weights are pre-cast bf16 (resident across the batch grid).  All matmul
    # accumulation is f32; bias add + ReLU stay f32.
    x = x_ref[...].astype(jnp.bfloat16)

    h1 = jnp.dot(x, w1_ref[...], preferred_element_type=jnp.float32) + b1_ref[...]
    h1 = jnp.maximum(h1, 0.0)

    h2 = jnp.dot(h1.astype(jnp.bfloat16), w2_ref[...],
                 preferred_element_type=jnp.float32) + b2_ref[...]
    h2 = jnp.maximum(h2, 0.0)

    out = jnp.dot(h2.astype(jnp.bfloat16), w3_ref[...],
                  preferred_element_type=jnp.float32) + b3_ref[...]
    o_ref[...] = out.astype(o_ref.dtype)


def prepare_qnet_params(params):
    """One-time prep: bf16 MXU operands for the weights, f32 biases.

    Call once after init / weight update, NOT per forward call.
    """
    w1, b1, w2, b2, w3, b3 = params
    return (w1.astype(jnp.bfloat16), b1.astype(jnp.float32),
            w2.astype(jnp.bfloat16), b2.astype(jnp.float32),
            w3.astype(jnp.bfloat16), b3.astype(jnp.float32))


@functools.partial(jax.jit, static_argnames=("batch_tile",))
def qnet_forward(x, prepped_params, *, batch_tile=4096):
    """x: [B, input_dim] float32 -> [B, output_dim] float32.

    `prepped_params` must come from prepare_qnet_params().
    """
    w1, b1, w2, b2, w3, b3 = prepped_params
    B, in_dim = x.shape
    hid = w1.shape[1]
    out_dim = w3.shape[1]

    # Tiling:
    #  - tiny batches (RL inference): one tile, grid=(1,) — zero pipeline
    #    bookkeeping, minimum latency.
    #  - larger batches: at least 2 grid steps so dimension_semantics
    #    ("parallel",) can shard across both TensorCores on v7x; batch_tile
    #    caps the per-step VMEM footprint (and amortizes ~0.35 us/step).
    MIN_SPLIT = 512
    if B < MIN_SPLIT:
        tile = B
    else:
        tile = min(batch_tile, _round_up(pl.cdiv(B, 2), 8))
    grid = (pl.cdiv(B, tile),)

    # Weights / biases: one full-array block, resident across the batch grid.
    full = lambda shape: pl.BlockSpec(shape, lambda i: (0, 0))

    flops = 2 * B * (in_dim * hid + hid * hid + hid * out_dim)
    bytes_accessed = (
        B * in_dim * 4                                      # x (f32 stream)
        + B * out_dim * 4                                   # f32 output
        + (in_dim * hid + hid * hid + hid * out_dim) * 2    # bf16 weights
        + (2 * hid + out_dim) * 4                           # f32 biases
    )

    return pl.pallas_call(
        qnet_kernel,
        out_shape=jax.ShapeDtypeStruct((B, out_dim), jnp.float32),
        grid=grid,
        in_specs=[
            pl.BlockSpec((tile, in_dim), lambda i: (i, 0)),  # x tile (streamed)
            full((in_dim, hid)),   # w1
            full((1, hid)),        # b1
            full((hid, hid)),      # w2
            full((1, hid)),        # b2
            full((hid, out_dim)),  # w3
            full((1, out_dim)),    # b3
        ],
        out_specs=pl.BlockSpec((tile, out_dim), lambda i: (i, 0)),
        compiler_params=pltpu.CompilerParams(
            dimension_semantics=("parallel",),
        ),
        cost_estimate=pl.CostEstimate(
            flops=int(flops), transcendentals=0,
            bytes_accessed=int(bytes_accessed)),
    )(x, w1, b1, w2, b2, w3, b3)


def init_qnet_params(key, input_dim, output_dim, hidden=64):
    """Init mirroring PyTorch nn.Linear default U(-1/sqrt(fan_in), 1/sqrt(fan_in))."""
    keys = jax.random.split(key, 6)

    def linear(kw, kb, fan_in, fan_out):
        bound = 1.0 / jnp.sqrt(jnp.float32(fan_in))
        w = jax.random.uniform(kw, (fan_in, fan_out), jnp.float32, -bound, bound)
        b = jax.random.uniform(kb, (1, fan_out), jnp.float32, -bound, bound)
        return w, b

    w1, b1 = linear(keys[0], keys[1], input_dim, hidden)
    w2, b2 = linear(keys[2], keys[3], hidden, hidden)
    w3, b3 = linear(keys[4], keys[5], hidden, output_dim)
    return (w1, b1, w2, b2, w3, b3)


def qnet_reference_f32(x, params):
    w1, b1, w2, b2, w3, b3 = params
    h1 = jnp.maximum(x @ w1 + b1, 0.0)
    h2 = jnp.maximum(h1 @ w2 + b2, 0.0)
    return h2 @ w3 + b3


def qnet_reference_bf16(x, params):
    """Mirrors the kernel numerics (bf16 operands, f32 accumulation)."""
    w1, b1, w2, b2, w3, b3 = params
    bf = jnp.bfloat16
    h1 = jnp.dot(x.astype(bf), w1.astype(bf),
                 preferred_element_type=jnp.float32) + b1
    h1 = jnp.maximum(h1, 0.0)
    h2 = jnp.dot(h1.astype(bf), w2.astype(bf),
                 preferred_element_type=jnp.float32) + b2
    h2 = jnp.maximum(h2, 0.0)
    return jnp.dot(h2.astype(bf), w3.astype(bf),
                   preferred_element_type=jnp.float32) + b3


if __name__ == "__main__":
    key = jax.random.PRNGKey(0)
    k_x, k_p, k_x2 = jax.random.split(key, 3)

    input_dim, output_dim = 32, 16
    params = init_qnet_params(k_p, input_dim, output_dim)
    prepped = prepare_qnet_params(params)   # one-time weight prep (hoisted)

    # Small-batch path (single tile, grid=(1,)) — typical RL inference shape.
    batch = 8
    x = jax.random.normal(k_x, (batch, input_dim), jnp.float32)
    out = jax.block_until_ready(qnet_forward(x, prepped))
    assert out.shape == (batch, output_dim)
    assert jnp.allclose(out, qnet_reference_bf16(x, params), atol=2e-3, rtol=2e-3)
    assert jnp.allclose(out, qnet_reference_f32(x, params), atol=5e-2, rtol=5e-2)

    # Larger batch: splits into 2 "parallel" grid steps (dual-TC on v7x).
    batch2 = 1024
    x2 = jax.random.normal(k_x2, (batch2, input_dim), jnp.float32)
    out2 = jax.block_until_ready(qnet_forward(x2, prepped))
    assert out2.shape == (batch2, output_dim)
    assert jnp.allclose(out2, qnet_reference_bf16(x2, params), atol=2e-3, rtol=2e-3)

    print("KERNEL_OK")
</pallas_src>

<mosaic_0001>
module attributes {stable_mosaic.version = 11 : i64} {
  func.func @qnet_kernel(%arg0: i32, %arg1: memref<8x32xf32, #tpu.memory_space<vmem>>, %arg2: memref<32x64xbf16, #tpu.memory_space<vmem>>, %arg3: memref<1x64xf32, #tpu.memory_space<vmem>>, %arg4: memref<64x64xbf16, #tpu.memory_space<vmem>>, %arg5: memref<1x64xf32, #tpu.memory_space<vmem>>, %arg6: memref<64x16xbf16, #tpu.memory_space<vmem>>, %arg7: memref<1x16xf32, #tpu.memory_space<vmem>>, %arg8: memref<8x16xf32, #tpu.memory_space<vmem>>) attributes {dimension_semantics = [#tpu.dimension_semantics<parallel>], iteration_bounds = array<i64: 1>, scalar_prefetch = 0 : i64, scratch_operands = 0 : i64, tpu.core_type = #tpu.core_type<tc>, window_params = [{transform_indices = @transform_0, window_bounds = array<i64: 8, 32>}, {pipeline_mode = #tpu.pipeline_mode<synchronous>, transform_indices = @transform_1, window_bounds = array<i64: 32, 64>}, {pipeline_mode = #tpu.pipeline_mode<synchronous>, transform_indices = @transform_2, window_bounds = array<i64: 1, 64>}, {pipeline_mode = #tpu.pipeline_mode<synchronous>, transform_indices = @transform_3, window_bounds = array<i64: 64, 64>}, {pipeline_mode = #tpu.pipeline_mode<synchronous>, transform_indices = @transform_4, window_bounds = array<i64: 1, 64>}, {pipeline_mode = #tpu.pipeline_mode<synchronous>, transform_indices = @transform_5, window_bounds = array<i64: 64, 16>}, {pipeline_mode = #tpu.pipeline_mode<synchronous>, transform_indices = @transform_6, window_bounds = array<i64: 1, 16>}, {transform_indices = @transform_7, window_bounds = array<i64: 8, 16>}]} {
    %c0 = arith.constant 0 : index
    %c0_0 = arith.constant 0 : index
    %0 = vector.load %arg1[%c0, %c0_0] : memref<8x32xf32, #tpu.memory_space<vmem>>, vector<8x32xf32>
    %1 = arith.truncf %0 : vector<8x32xf32> to vector<8x32xbf16>
    %c0_1 = arith.constant 0 : index
    %c0_2 = arith.constant 0 : index
    %2 = vector.load %arg2[%c0_1, %c0_2] : memref<32x64xbf16, #tpu.memory_space<vmem>>, vector<32x64xbf16>
    %cst = arith.constant dense<0.000000e+00> : vector<8x64xf32>
    %3 = tpu.matmul %1, %2, %cst {dimension_numbers = #tpu.dot_dimension_numbers<[1], [0], [0], [1], [0, 0, 1, 1], [], []>} : vector<8x32xbf16>, vector<32x64xbf16>, vector<8x64xf32> -> vector<8x64xf32>
    %c0_3 = arith.constant 0 : index
    %c0_4 = arith.constant 0 : index
    %4 = vector.load %arg3[%c0_3, %c0_4] : memref<1x64xf32, #tpu.memory_space<vmem>>, vector<1x64xf32>
    %5 = vector.broadcast %4 : vector<1x64xf32> to vector<8x64xf32>
    %6 = arith.addf %3, %5 : vector<8x64xf32>
    %cst_5 = arith.constant 0.000000e+00 : f32
    %7 = vector.broadcast %cst_5 : f32 to vector<8x64xf32>
    %8 = arith.maximumf %6, %7 : vector<8x64xf32>
    %9 = arith.truncf %8 : vector<8x64xf32> to vector<8x64xbf16>
    %c0_6 = arith.constant 0 : index
    %c0_7 = arith.constant 0 : index
    %10 = vector.load %arg4[%c0_6, %c0_7] : memref<64x64xbf16, #tpu.memory_space<vmem>>, vector<64x64xbf16>
    %cst_8 = arith.constant dense<0.000000e+00> : vector<8x64xf32>
    %11 = tpu.matmul %9, %10, %cst_8 {dimension_numbers = #tpu.dot_dimension_numbers<[1], [0], [0], [1], [0, 0, 1, 1], [], []>} : vector<8x64xbf16>, vector<64x64xbf16>, vector<8x64xf32> -> vector<8x64xf32>
    %c0_9 = arith.constant 0 : index
    %c0_10 = arith.constant 0 : index
    %12 = vector.load %arg5[%c0_9, %c0_10] : memref<1x64xf32, #tpu.memory_space<vmem>>, vector<1x64xf32>
    %13 = vector.broadcast %12 : vector<1x64xf32> to vector<8x64xf32>
    %14 = arith.addf %11, %13 : vector<8x64xf32>
    %cst_11 = arith.constant 0.000000e+00 : f32
    %15 = vector.broadcast %cst_11 : f32 to vector<8x64xf32>
    %16 = arith.maximumf %14, %15 : vector<8x64xf32>
    %17 = arith.truncf %16 : vector<8x64xf32> to vector<8x64xbf16>
    %c0_12 = arith.constant 0 : index
    %c0_13 = arith.constant 0 : index
    %18 = vector.load %arg6[%c0_12, %c0_13] : memref<64x16xbf16, #tpu.memory_space<vmem>>, vector<64x16xbf16>
    %cst_14 = arith.constant dense<0.000000e+00> : vector<8x16xf32>
    %19 = tpu.matmul %17, %18, %cst_14 {dimension_numbers = #tpu.dot_dimension_numbers<[1], [0], [0], [1], [0, 0, 1, 1], [], []>} : vector<8x64xbf16>, vector<64x16xbf16>, vector<8x16xf32> -> vector<8x16xf32>
    %c0_15 = arith.constant 0 : index
    %c0_16 = arith.constant 0 : index
    %20 = vector.load %arg7[%c0_15, %c0_16] : memref<1x16xf32, #tpu.memory_space<vmem>>, vector<1x16xf32>
    %21 = vector.broadcast %20 : vector<1x16xf32> to vector<8x16xf32>
    %22 = arith.addf %19, %21 : vector<8x16xf32>
    %c0_17 = arith.constant 0 : index
    %c0_18 = arith.constant 0 : index
    %23 = vector.load %arg8[%c0_17, %c0_18] : memref<8x16xf32, #tpu.memory_space<vmem>>, vector<8x16xf32>
    tpu.vector_store %arg8[%c0_17, %c0_18], %22 {strides = array<i32>} : memref<8x16xf32, #tpu.memory_space<vmem>>, vector<8x16xf32>,
    return
  }
  func.func @transform_0(%arg0: i32) -> (i32, i32) {
    %c0_i32 = arith.constant 0 : i32
    %c0_i32_0 = arith.constant 0 : i32
    return %arg0, %c0_i32 : i32, i32
  }
  func.func @transform_1(%arg0: i32) -> (i32, i32) {
    %c0_i32 = arith.constant 0 : i32
    %c0_i32_0 = arith.constant 0 : i32
    %c0_i32_1 = arith.constant 0 : i32
    return %c0_i32, %c0_i32_0 : i32, i32
  }
  func.func @transform_2(%arg0: i32) -> (i32, i32) {
    %c0_i32 = arith.constant 0 : i32
    %c0_i32_0 = arith.constant 0 : i32
    %c0_i32_1 = arith.constant 0 : i32
    return %c0_i32, %c0_i32_0 : i32, i32
  }
  func.func @transform_3(%arg0: i32) -> (i32, i32) {
    %c0_i32 = arith.constant 0 : i32
    %c0_i32_0 = arith.constant 0 : i32
    %c0_i32_1 = arith.constant 0 : i32
    return %c0_i32, %c0_i32_0 : i32, i32
  }
  func.func @transform_4(%arg0: i32) -> (i32, i32) {
    %c0_i32 = arith.constant 0 : i32
    %c0_i32_0 = arith.constant 0 : i32
    %c0_i32_1 = arith.constant 0 : i32
    return %c0_i32, %c0_i32_0 : i32, i32
  }
  func.func @transform_5(%arg0: i32) -> (i32, i32) {
    %c0_i32 = arith.constant 0 : i32
    %c0_i32_0 = arith.constant 0 : i32
    %c0_i32_1 = arith.constant 0 : i32
    return %c0_i32, %c0_i32_0 : i32, i32
  }
  func.func @transform_6(%arg0: i32) -> (i32, i32) {
    %c0_i32 = arith.constant 0 : i32
    %c0_i32_0 = arith.constant 0 : i32
    %c0_i32_1 = arith.constant 0 : i32
    return %c0_i32, %c0_i32_0 : i32, i32
  }
  func.func @transform_7(%arg0: i32) -> (i32, i32) {
    %c0_i32 = arith.constant 0 : i32
    %c0_i32_0 = arith.constant 0 : i32
    return %arg0, %c0_i32 : i32, i32
  }
}

</mosaic_0001>

<llo_original>
// kernel: qnet_forward.1
$region0: #{qnet_forward.1}
  #allocation0 [shape = 'u32[]', space=smem, size = 0x4, offset = 0x4, fixed_abs, tag = 'smem constant byte address 0x4 - core index']
  #allocation1 [shape = 'u32[144,128]{1,0:T(1,128)}', space=vmem, size = 0x12000, scoped, tag = 'internal scratch']
  %s0 = inlined_call_operand.vmem [shape: f32[8,32], index: 0, kind: input, shape index: {}]
  %s1 = inlined_call_operand.hbm [shape: bf16[32,64], index: 1, kind: input, shape index: {}]
  %s2 = inlined_call_operand.vmem [shape: f32[1,64], index: 2, kind: input, shape index: {}]
  %s3 = inlined_call_operand.vmem [shape: bf16[64,64], index: 3, kind: input, shape index: {}]
  %s4 = inlined_call_operand.hbm [shape: f32[1,64], index: 4, kind: input, shape index: {}]
  %s5 = inlined_call_operand.vmem [shape: bf16[64,16], index: 5, kind: input, shape index: {}]
  %s6 = inlined_call_operand.vmem [shape: f32[1,16], index: 6, kind: input, shape index: {}]
  %s7 = inlined_call_operand.hbm [shape: f32[8,16], index: 7, kind: output, shape index: {}]
  %s8 = sld [smem:[#allocation0]]
  $region46: #{qnet_forward.1} parent=0
    _
  %s10 = ssub.s32 1, %s8
  %s11 = scalar_select 0, %s10, %s8
  $region1: #{qnet_forward.1} parent=0
    #allocation2 [shape = 'u8[8192]{0}', space=vmem, size = 0x2000, scoped, tag = 'input window, operand 1, single buffered']
    #allocation3 [shape = 's32[1]{0}', space=sflag, size = 0x4, scoped, tag = 'scoped memory for qnet_forward.1']
    #allocation4 [shape = 's32[1]{0}', space=sflag, size = 0x4, scoped, tag = 'scoped memory for qnet_forward.1']
    #allocation5 [shape = 'u8[512]{0}', space=vmem, size = 0x400, scoped, tag = 'input window, operand 4, single buffered']
    #allocation6 [shape = 's32[1]{0}', space=sflag, size = 0x4, scoped, tag = 'scoped memory for qnet_forward.1']
    #allocation7 [shape = 'u8[4096]{0}', space=vmem, size = 0x1000, scoped, tag = 'output window, operand 0, single buffered']
    %12 = vsyncpa [#allocation3], 0
    %13 = vsyncpa [#allocation6], 0
    %14 = vsyncpa [#allocation4], 0
    // Predicated region
    $region2: #{qnet_forward.1} parent=1 // pred_check
      _
    $region3: #{qnet_forward.1} parent=1 // pred_check_branch
      %16 = sbr.rel (0) target = $region5
    $region4: #{qnet_forward.1} parent=1 // pred_region
      _
    $region5: #{qnet_forward.1} parent=1 // pred_fallthru
      _
    // Predicated region
    $region6: #{qnet_forward.1} parent=1 // pred_check
      _
    $region7: #{qnet_forward.1} parent=1 // pred_check_branch
      %18 = sbr.rel (0) target = $region9
    $region8: #{qnet_forward.1} parent=1 // pred_region
      %s20 = ssub.s32 256, 256
      %21 = vsyncadd [#allocation3], %s20
      %s22 = sshll.u32 [#allocation2], 4
      %s23 = int_to_ptr.vmem [resolvable:$true] %s22
      %28 = dma.hbm_to_vmem [thread:$0]  %s1, 256, %s23, [#allocation3], 64, 64, 4
    $region9: #{qnet_forward.1} parent=1 // pred_fallthru
      _
    // Predicated region
    $region10: #{qnet_forward.1} parent=1 // pred_check
      _
    $region11: #{qnet_forward.1} parent=1 // pred_check_branch
      %30 = sbr.rel (0) target = $region13
    $region12: #{qnet_forward.1} parent=1 // pred_region
      _
    $region13: #{qnet_forward.1} parent=1 // pred_fallthru
      _
    // Predicated region
    $region14: #{qnet_forward.1} parent=1 // pred_check
      _
    $region15: #{qnet_forward.1} parent=1 // pred_check_branch
      %32 = sbr.rel (0) target = $region17
    $region16: #{qnet_forward.1} parent=1 // pred_region
      _
    $region17: #{qnet_forward.1} parent=1 // pred_fallthru
      _
    // Predicated region
    $region18: #{qnet_forward.1} parent=1 // pred_check
      _
    $region19: #{qnet_forward.1} parent=1 // pred_check_branch
      %34 = sbr.rel (0) target = $region21
    $region20: #{qnet_forward.1} parent=1 // pred_region
      %s36 = ssub.s32 16, 16
      %37 = vsyncadd [#allocation6], %s36
      %s39 = sshll.u32 [#allocation5], 4
      %s40 = int_to_ptr.vmem [resolvable:$true] %s39
      %42 = dma.hbm_to_vmem [thread:$0]  %s4, 16, %s40, [#allocation6]
    $region21: #{qnet_forward.1} parent=1 // pred_fallthru
      _
    // Predicated region
    $region22: #{qnet_forward.1} parent=1 // pred_check
      _
    $region23: #{qnet_forward.1} parent=1 // pred_check_branch
      %44 = sbr.rel (0) target = $region25
    $region24: #{qnet_forward.1} parent=1 // pred_region
      _
    $region25: #{qnet_forward.1} parent=1 // pred_fallthru
      _
    // Predicated region
    $region26: #{qnet_forward.1} parent=1 // pred_check
      _
    $region27: #{qnet_forward.1} parent=1 // pred_check_branch
      %46 = sbr.rel (0) target = $region29
    $region28: #{qnet_forward.1} parent=1 // pred_region
      _
    $region29: #{qnet_forward.1} parent=1 // pred_fallthru
      _
    // Predicated region
    $region30: #{qnet_forward.1} parent=1 // pred_check
      _
    $region31: #{qnet_forward.1} parent=1 // pred_check_branch
      %48 = sbr.rel (0) target = $region33
    $region32: #{qnet_forward.1} parent=1 // pred_region
      %49 = dma.done [#allocation3], 256
    $region33: #{qnet_forward.1} parent=1 // pred_fallthru
      _
    // Predicated region
    $region34: #{qnet_forward.1} parent=1 // pred_check
      _
    $region35: #{qnet_forward.1} parent=1 // pred_check_branch
      %51 = sbr.rel (0) target = $region37
    $region36: #{qnet_forward.1} parent=1 // pred_region
      %52 = dma.done [#allocation6], 16
    $region37: #{qnet_forward.1} parent=1 // pred_fallthru
      _
    %v54 = vld [vmem:[%s0] sm:$0xff]
    %v55 = vpack.c.bf16 %v54, %v54
    %v56 = vld [vmem:[#allocation2] sm:$0xf]
    %v57 = vld [vmem:[#allocation2 + $0x4] sm:$0xf]
    %v58 = vld [vmem:[#allocation2 + $0x8] sm:$0xf]
    %v59 = vld [vmem:[#allocation2 + $0xc] sm:$0xf]
    %v60 = vld [vmem:[%s2] sm:$0x1]
    %v62 = vlaneseq
    %v63 = vshrl.u32 %v62, 7
    %v64 = vsub.s32 0, %v63
    %v65 = vrot.slane %v60, %v64
    %v71 = vunpack.c.l.b16 %v56
    %v72 = vunpack.c.l.b16 %v57
    %v73 = vunpack.c.l.b16 %v58
    %v74 = vunpack.c.l.b16 %v59
    %v75 = vpack.c.b16 %v72, %v71
    %v76 = vpack.c.b16 %v74, %v73
    %vm79 = vcmask 261120
    %v81 = vsel %vm79, %v55, 0
    %83 = vmatprep.subr.bf16.mxu0 0
    %84 = vmatpush1.bf16.msra.mxu0 0
    %85 = vmatprep.subr.bf16.mxu0 0
    %86 = vmatpush1.bf16.msra.mxu0 0
    %87 = vmatprep.subr.bf16.mxu0 0
    %88 = vmatpush1.bf16.msra.mxu0 0
    %89 = vmatprep.subr.bf16.mxu0 0
    %90 = vmatpush1.bf16.msra.mxu0 0
    %91 = vmatprep.subr.bf16.mxu0 0
    %92 = vmatpush1.bf16.msra.mxu0 0
    %93 = vmatprep.subr.bf16.mxu0 0
    %94 = vmatpush1.bf16.msra.mxu0 0
    %95 = vmatprep.subr.bf16.mxu0 0
    %96 = vmatpush1.bf16.msra.mxu0 %v76
    %97 = vmatprep.subr.bf16.mxu0 0
    %98 = vmatpush1.bf16.msra.mxu0 %v75
    %99 = vmatprep.subr.bf16.mxu0 0
    %100 = vmatpush2.bf16.msra.mxu0 0
    %101 = vmatprep.subr.bf16.mxu0 0
    %102 = vmatpush2.bf16.msra.mxu0 0
    %103 = vmatprep.subr.bf16.mxu0 0
    %104 = vmatpush2.bf16.msra.mxu0 0
    %105 = vmatprep.subr.bf16.mxu0 0
    %106 = vmatpush2.bf16.msra.mxu0 0
    %107 = vmatprep.subr.bf16.mxu0 0
    %108 = vmatpush2.bf16.msra.mxu0 0
    %109 = vmatprep.subr.bf16.mxu0 0
    %110 = vmatpush2.bf16.msra.mxu0 0
    %111 = vmatprep.subr.bf16.mxu0 0
    %112 = vmatpush2.bf16.msra.mxu0 0
    %113 = vmatprep.subr.bf16.mxu0 0
    %114 = vmatpush2.bf16.msra.mxu0 0
    %115 = vmatprep.mubr.bf16.mxu0 0
    %116 = vmatmul.mubr.bf16.gmra.mxu0 %v81
    %v117 = vpop.f32.mrf.mxu0
    %v118 = vadd.f32 %v65, %v117
    %v119 = vpop.f32.mrf.mxu0
    %v120 = vpop.f32.mrf.mxu0
    %v121 = vpop.f32.mrf.mxu0
    %122 = vdwg.mxu0
    %v123 = vmax.f32 %v118, 0.0
    %v124 = vpack.c.bf16 %v123, %v123
    %v125 = vld [vmem:[%s3] sm:$0xf]
    %v126 = vld [vmem:[%s3 + $0x4] sm:$0xf]
    %v127 = vld [vmem:[%s3 + $0x8] sm:$0xf]
    %v128 = vld [vmem:[%s3 + $0xc] sm:$0xf]
    %v129 = vld [vmem:[%s3 + $0x10] sm:$0xf]
    %v130 = vld [vmem:[%s3 + $0x14] sm:$0xf]
    %v131 = vld [vmem:[%s3 + $0x18] sm:$0xf]
    %v132 = vld [vmem:[%s3 + $0x1c] sm:$0xf]
    %v133 = vld [vmem:[#allocation5] sm:$0x1]
    %v135 = vlaneseq
    %v136 = vshrl.u32 %v135, 7
    %v137 = vsub.s32 0, %v136
    %v138 = vrot.slane %v133, %v137
    %v148 = vunpack.c.l.b16 %v125
    %v149 = vunpack.c.l.b16 %v126
    %v150 = vunpack.c.l.b16 %v127
    %v151 = vunpack.c.l.b16 %v128
    %v152 = vunpack.c.l.b16 %v129
    %v153 = vunpack.c.l.b16 %v130
    %v154 = vunpack.c.l.b16 %v131
    %v155 = vunpack.c.l.b16 %v132
    %v156 = vpack.c.b16 %v149, %v148
    %v157 = vpack.c.b16 %v151, %v150
    %v158 = vpack.c.b16 %v153, %v152
    %v159 = vpack.c.b16 %v155, %v154
    %vm164 = vcmask 523264
    %v166 = vsel %vm164, %v124, 0
    %168 = vmatprep.subr.bf16.mxu0 0
    %169 = vmatpush1.bf16.msra.mxu0 0
    %170 = vmatprep.subr.bf16.mxu0 0
    %171 = vmatpush1.bf16.msra.mxu0 0
    %172 = vmatprep.subr.bf16.mxu0 0
    %173 = vmatpush1.bf16.msra.mxu0 0
    %174 = vmatprep.subr.bf16.mxu0 0
    %175 = vmatpush1.bf16.msra.mxu0 0
    %176 = vmatprep.subr.bf16.mxu0 0
    %177 = vmatpush1.bf16.msra.mxu0 %v159
    %178 = vmatprep.subr.bf16.mxu0 0
    %179 = vmatpush1.bf16.msra.mxu0 %v158
    %180 = vmatprep.subr.bf16.mxu0 0
    %181 = vmatpush1.bf16.msra.mxu0 %v157
    %182 = vmatprep.subr.bf16.mxu0 0
    %183 = vmatpush1.bf16.msra.mxu0 %v156
    %184 = vmatprep.subr.bf16.mxu0 0
    %185 = vmatpush2.bf16.msra.mxu0 0
    %186 = vmatprep.subr.bf16.mxu0 0
    %187 = vmatpush2.bf16.msra.mxu0 0
    %188 = vmatprep.subr.bf16.mxu0 0
    %189 = vmatpush2.bf16.msra.mxu0 0
    %190 = vmatprep.subr.bf16.mxu0 0
    %191 = vmatpush2.bf16.msra.mxu0 0
    %192 = vmatprep.subr.bf16.mxu0 0
    %193 = vmatpush2.bf16.msra.mxu0 0
    %194 = vmatprep.subr.bf16.mxu0 0
    %195 = vmatpush2.bf16.msra.mxu0 0
    %196 = vmatprep.subr.bf16.mxu0 0
    %197 = vmatpush2.bf16.msra.mxu0 0
    %198 = vmatprep.subr.bf16.mxu0 0
    %199 = vmatpush2.bf16.msra.mxu0 0
    %200 = vmatprep.mubr.bf16.mxu0 0
    %201 = vmatmul.mubr.bf16.gmra.mxu0 %v166
    %v202 = vpop.f32.mrf.mxu0
    %v203 = vadd.f32 %v138, %v202
    %v204 = vpop.f32.mrf.mxu0
    %v205 = vpop.f32.mrf.mxu0
    %v206 = vpop.f32.mrf.mxu0
    %207 = vdwg.mxu0
    %v208 = vmax.f32 %v203, 0.0
    %v209 = vpack.c.bf16 %v208, %v208
    %v210 = vld [vmem:[%s5] sm:$0xf]
    %v211 = vld [vmem:[%s5 + $0x4] sm:$0xf]
    %v212 = vld [vmem:[%s5 + $0x8] sm:$0xf]
    %v213 = vld [vmem:[%s5 + $0xc] sm:$0xf]
    %v214 = vld [vmem:[%s5 + $0x10] sm:$0xf]
    %v215 = vld [vmem:[%s5 + $0x14] sm:$0xf]
    %v216 = vld [vmem:[%s5 + $0x18] sm:$0xf]
    %v217 = vld [vmem:[%s5 + $0x1c] sm:$0xf]
    %v218 = vld [vmem:[%s6] sm:$0x1]
    %v220 = vlaneseq
    %v221 = vshrl.u32 %v220, 7
    %v222 = vsub.s32 0, %v221
    %v223 = vrot.slane %v218, %v222
    %v233 = vunpack.c.l.b16 %v210
    %v234 = vunpack.c.l.b16 %v211
    %v235 = vunpack.c.l.b16 %v212
    %v236 = vunpack.c.l.b16 %v213
    %v237 = vunpack.c.l.b16 %v214
    %v238 = vunpack.c.l.b16 %v215
    %v239 = vunpack.c.l.b16 %v216
    %v240 = vunpack.c.l.b16 %v217
    %v241 = vpack.c.b16 %v234, %v233
    %v242 = vpack.c.b16 %v236, %v235
    %v243 = vpack.c.b16 %v238, %v237
    %v244 = vpack.c.b16 %v240, %v239
    %v250 = vsel %vm164, %v209, 0
    %252 = vmatprep.subr.bf16.mxu0 0
    %253 = vmatpush1.bf16.msra.mxu0 0
    %254 = vmatprep.subr.bf16.mxu0 0
    %255 = vmatpush1.bf16.msra.mxu0 0
    %256 = vmatprep.subr.bf16.mxu0 0
    %257 = vmatpush1.bf16.msra.mxu0 0
    %258 = vmatprep.subr.bf16.mxu0 0
    %259 = vmatpush1.bf16.msra.mxu0 0
    %260 = vmatprep.subr.bf16.mxu0 0
    %261 = vmatpush1.bf16.msra.mxu0 %v244
    %262 = vmatprep.subr.bf16.mxu0 0
    %263 = vmatpush1.bf16.msra.mxu0 %v243
    %264 = vmatprep.subr.bf16.mxu0 0
    %265 = vmatpush1.bf16.msra.mxu0 %v242
    %266 = vmatprep.subr.bf16.mxu0 0
    %267 = vmatpush1.bf16.msra.mxu0 %v241
    %268 = vmatprep.subr.bf16.mxu0 0
    %269 = vmatpush2.bf16.msra.mxu0 0
    %270 = vmatprep.subr.bf16.mxu0 0
    %271 = vmatpush2.bf16.msra.mxu0 0
    %272 = vmatprep.subr.bf16.mxu0 0
    %273 = vmatpush2.bf16.msra.mxu0 0
    %274 = vmatprep.subr.bf16.mxu0 0
    %275 = vmatpush2.bf16.msra.mxu0 0
    %276 = vmatprep.subr.bf16.mxu0 0
    %277 = vmatpush2.bf16.msra.mxu0 0
    %278 = vmatprep.subr.bf16.mxu0 0
    %279 = vmatpush2.bf16.msra.mxu0 0
    %280 = vmatprep.subr.bf16.mxu0 0
    %281 = vmatpush2.bf16.msra.mxu0 0
    %282 = vmatprep.subr.bf16.mxu0 0
    %283 = vmatpush2.bf16.msra.mxu0 0
    %284 = vmatprep.mubr.bf16.mxu0 0
    %285 = vmatmul.mubr.bf16.gmra.mxu0 %v250
    %v286 = vpop.f32.mrf.mxu0
    %v287 = vadd.f32 %v223, %v286
    %v288 = vpop.f32.mrf.mxu0
    %v289 = vpop.f32.mrf.mxu0
    %v290 = vpop.f32.mrf.mxu0
    %291 = vdwg.mxu0
    %vm292 = vcmask 130048
    %293 = vst.msk [vmem:[#allocation7] sm:$0xff] %vm292, %v287
    // Predicated region
    $region38: #{qnet_forward.1} parent=1 // pred_check
      _
    $region39: #{qnet_forward.1} parent=1 // pred_check_branch
      %295 = sbr.rel (0) target = $region41
    $region40: #{qnet_forward.1} parent=1 // pred_region
      %s297 = ssub.s32 128, 128
      %298 = vsyncadd [#allocation4], %s297
      %s300 = sshll.u32 [#allocation7], 4
      %s301 = int_to_ptr.vmem [resolvable:$true] %s300
      %303 = dma.vmem_to_hbm [thread:$0]  %s301, 128, %s7, [#allocation4]
    $region41: #{qnet_forward.1} parent=1 // pred_fallthru
      _
    // Predicated region
    $region42: #{qnet_forward.1} parent=1 // pred_check
      _
    $region43: #{qnet_forward.1} parent=1 // pred_check_branch
      %305 = sbr.rel (0) target = $region45
    $region44: #{qnet_forward.1} parent=1 // pred_region
      %306 = dma.done [#allocation4], 128
    $region45: #{qnet_forward.1} parent=1 // pred_fallthru
      _
    %307 = vsyncpa [#allocation3], 1
    %308 = vsyncpa [#allocation6], 1
    %309 = vsyncpa [#allocation4], 1

</llo_original>
